<compile_context>
chip_gen: v7x
topology: tpu7x:2x2x1
jax: 0.10.0
libtpu: 0.0.40
codegen_flags: <defaults>
</compile_context>

<pallas_src>
import jax
import jax.numpy as jnp
from jax.experimental import pallas as pl
from jax.experimental.pallas import tpu as pltpu


def _proj_kernel(t_ref, w_ref, b_ref, scale_ref, shift_ref):
    # Single grid step: ss = SiLU(t) @ W + b ; split halves; fold (+1) into scale.
    t = t_ref[...].astype(jnp.float32)
    silu = t * (1.0 / (1.0 + jnp.exp(-t)))                     # SiLU (EUP exp)
    ss = jnp.dot(silu, w_ref[...].astype(jnp.float32),
                 preferred_element_type=jnp.float32)           # (B, 2D) on MXU
    ss = ss + b_ref[...].astype(jnp.float32)                   # bias (1, 2D)
    d = scale_ref.shape[-1]
    scale_ref[...] = ss[:, :d] + 1.0                           # scale + 1
    shift_ref[...] = ss[:, d:]


def _apply_kernel(x_ref, s_ref, sh_ref, o_ref):
    # x block (1, TL, D); s/sh full (B, D) f32, resident in VMEM.
    bi = pl.program_id(0)
    x = x_ref[...].astype(jnp.float32)                         # (1, TL, D)
    s = s_ref[pl.ds(bi, 1), :][:, None, :]                     # (1, 1, D), "+1" pre-folded
    sh = sh_ref[pl.ds(bi, 1), :][:, None, :]                   # (1, 1, D)
    o_ref[...] = (x * s + sh).astype(o_ref.dtype)              # pure FMA


def _vmem_capacity_bytes():
    try:
        cap = pltpu.get_tpu_info().vmem_capacity_bytes
        if cap:
            return int(cap)
    except Exception:
        pass
    return 64 * 1024 * 1024  # conservative default (v7x per-TC)


def _choose_tile_l(L, D, itemsize, pipeline_budget_bytes):
    # Double-buffered x tile + double-buffered out tile = 4 * TL * D * itemsize.
    per_row = 4 * max(D, 1) * itemsize
    rows = max(8, pipeline_budget_bytes // per_row)
    tl = int(min(L, rows, 2048))
    if tl >= L:
        return L
    return max(8, (tl // 8) * 8)  # sublane-aligned tile


def conditional_scale_shift(x, t, w, b):
    """x: (B, L, D); t: (B, T); w: (T, 2D); b: (2D,). Returns (B, L, D)."""
    B, L, D = x.shape
    T = t.shape[-1]
    assert w.shape == (T, 2 * D) and b.shape == (2 * D,)

    # ---- stage 1: per-sample (scale+1, shift) projection (tiny) -------------
    scale_p1, shift = pl.pallas_call(
        _proj_kernel,
        out_shape=(jax.ShapeDtypeStruct((B, D), jnp.float32),
                   jax.ShapeDtypeStruct((B, D), jnp.float32)),
    )(t, w, b.reshape(1, 2 * D))

    # ---- stage 2: x * (scale + 1) + shift, tiled over (B, L) ----------------
    itemsize = jnp.dtype(x.dtype).itemsize
    vmem_cap = _vmem_capacity_bytes()
    vmem_limit = int(min(vmem_cap // 2, 100 * 2 ** 20))        # scoped VMEM w/ headroom
    tl = _choose_tile_l(L, D, itemsize, vmem_limit // 2)
    grid = (B, pl.cdiv(L, tl))

    cost = pl.CostEstimate(
        flops=2 * B * L * D,
        transcendentals=0,
        bytes_accessed=2 * B * L * D * itemsize + 2 * B * D * 4,
    )

    return pl.pallas_call(
        _apply_kernel,
        out_shape=jax.ShapeDtypeStruct((B, L, D), x.dtype),
        grid_spec=pltpu.PrefetchScalarGridSpec(
            num_scalar_prefetch=0,
            grid=grid,
            in_specs=[
                pl.BlockSpec((1, tl, D), lambda bi, li: (bi, li, 0)),
                pl.BlockSpec((B, D), lambda bi, li: (0, 0)),   # resident in VMEM
                pl.BlockSpec((B, D), lambda bi, li: (0, 0)),   # resident in VMEM
            ],
            out_specs=pl.BlockSpec((1, tl, D), lambda bi, li: (bi, li, 0)),
        ),
        compiler_params=pltpu.CompilerParams(
            dimension_semantics=("parallel", "parallel"),
            vmem_limit_bytes=vmem_limit,
        ),
        cost_estimate=cost,
    )(x, scale_p1, shift)


def _reference(x, t, w, b):
    tf = t.astype(jnp.float32)
    silu = tf * (1.0 / (1.0 + jnp.exp(-tf)))
    ss = silu @ w.astype(jnp.float32) + b.astype(jnp.float32)
    D = x.shape[-1]
    scale, shift = ss[:, :D], ss[:, D:]
    out = x.astype(jnp.float32) * (scale[:, None, :] + 1.0) + shift[:, None, :]
    return out.astype(x.dtype)


if __name__ == "__main__":
    key = jax.random.PRNGKey(0)
    k1, k2, k3, k4 = jax.random.split(key, 4)
    B, L, D, T = 2, 8, 32, 16  # batch, seq, hidden (dim), time_emb_dim

    x = jax.random.normal(k1, (B, L, D), dtype=jnp.float32)
    t = jax.random.normal(k2, (B, T), dtype=jnp.float32)
    w = jax.random.normal(k3, (T, 2 * D), dtype=jnp.float32) * (1.0 / T ** 0.5)
    b = jax.random.normal(k4, (2 * D,), dtype=jnp.float32) * 0.02

    out = conditional_scale_shift(x, t, w, b)
    out = jax.block_until_ready(out)

    ref = _reference(x, t, w, b)
    assert out.shape == (B, L, D)
    assert jnp.allclose(out, ref, atol=1e-5, rtol=1e-5), "mismatch vs reference"
    print("KERNEL_OK")
</pallas_src>

<mosaic_0001>
module attributes {stable_mosaic.version = 11 : i64} {
  func.func @_proj_kernel(%arg0: memref<2x16xf32, #tpu.memory_space<vmem>>, %arg1: memref<16x64xf32, #tpu.memory_space<vmem>>, %arg2: memref<1x64xf32, #tpu.memory_space<vmem>>, %arg3: memref<2x32xf32, #tpu.memory_space<vmem>>, %arg4: memref<2x32xf32, #tpu.memory_space<vmem>>) attributes {dimension_semantics = [], scalar_prefetch = 0 : i64, scratch_operands = 0 : i64, tpu.core_type = #tpu.core_type<tc>} {
    %c0 = arith.constant 0 : index
    %c0_0 = arith.constant 0 : index
    %0 = vector.load %arg0[%c0, %c0_0] : memref<2x16xf32, #tpu.memory_space<vmem>>, vector<2x16xf32>
    %cst = arith.constant 0.000000e+00 : f32
    %1 = vector.broadcast %cst : f32 to vector<2x16xf32>
    %2 = arith.subf %1, %0 : vector<2x16xf32>
    %3 = math.exp %2 : vector<2x16xf32>
    %cst_1 = arith.constant 1.000000e+00 : f32
    %4 = vector.broadcast %cst_1 : f32 to vector<2x16xf32>
    %5 = arith.addf %4, %3 : vector<2x16xf32>
    %cst_2 = arith.constant 1.000000e+00 : f32
    %6 = vector.broadcast %cst_2 : f32 to vector<2x16xf32>
    %7 = arith.divf %6, %5 : vector<2x16xf32>
    %8 = arith.mulf %0, %7 : vector<2x16xf32>
    %c0_3 = arith.constant 0 : index
    %c0_4 = arith.constant 0 : index
    %9 = vector.load %arg1[%c0_3, %c0_4] : memref<16x64xf32, #tpu.memory_space<vmem>>, vector<16x64xf32>
    %cst_5 = arith.constant dense<0.000000e+00> : vector<2x64xf32>
    %10 = tpu.matmul %8, %9, %cst_5 {dimension_numbers = #tpu.dot_dimension_numbers<[1], [0], [0], [1], [0, 0, 1, 1], [], []>} : vector<2x16xf32>, vector<16x64xf32>, vector<2x64xf32> -> vector<2x64xf32>
    %c0_6 = arith.constant 0 : index
    %c0_7 = arith.constant 0 : index
    %11 = vector.load %arg2[%c0_6, %c0_7] : memref<1x64xf32, #tpu.memory_space<vmem>>, vector<1x64xf32>
    %12 = vector.broadcast %11 : vector<1x64xf32> to vector<2x64xf32>
    %13 = arith.addf %10, %12 : vector<2x64xf32>
    %14 = vector.extract_strided_slice %13 {offsets = [0, 0], sizes = [2, 32], strides = [1, 1]} : vector<2x64xf32> to vector<2x32xf32>
    %cst_8 = arith.constant 1.000000e+00 : f32
    %15 = vector.broadcast %cst_8 : f32 to vector<2x32xf32>
    %16 = arith.addf %14, %15 : vector<2x32xf32>
    %c0_9 = arith.constant 0 : index
    %c0_10 = arith.constant 0 : index
    %17 = vector.load %arg3[%c0_9, %c0_10] : memref<2x32xf32, #tpu.memory_space<vmem>>, vector<2x32xf32>
    tpu.vector_store %arg3[%c0_9, %c0_10], %16 {strides = array<i32>} : memref<2x32xf32, #tpu.memory_space<vmem>>, vector<2x32xf32>,
    %18 = vector.extract_strided_slice %13 {offsets = [0, 32], sizes = [2, 32], strides = [1, 1]} : vector<2x64xf32> to vector<2x32xf32>
    %c0_11 = arith.constant 0 : index
    %c0_12 = arith.constant 0 : index
    %19 = vector.load %arg4[%c0_11, %c0_12] : memref<2x32xf32, #tpu.memory_space<vmem>>, vector<2x32xf32>
    tpu.vector_store %arg4[%c0_11, %c0_12], %18 {strides = array<i32>} : memref<2x32xf32, #tpu.memory_space<vmem>>, vector<2x32xf32>,
    return
  }
}

</mosaic_0001>

<llo_original>
// kernel: tpu_custom_call.1
$region0: #{tpu_custom_call.1}
  #allocation0 [shape = 'u32[]', space=smem, size = 0x4, offset = 0x4, fixed_abs, tag = 'smem constant byte address 0x4 - core index']
  #allocation1 [shape = 'u32[144,128]{1,0:T(1,128)}', space=vmem, size = 0x12000, scoped, tag = 'internal scratch']
  %s0 = inlined_call_operand.hbm [shape: f32[2,16], index: 0, kind: input, shape index: {}]
  %s1 = inlined_call_operand.hbm [shape: f32[16,64], index: 1, kind: input, shape index: {}]
  %s2 = inlined_call_operand.vmem [shape: f32[1,64], index: 2, kind: input, shape index: {}]
  %s3 = inlined_call_operand.hbm [shape: f32[2,32], index: 3, kind: output, shape index: {0}]
  %s4 = inlined_call_operand.hbm [shape: f32[2,32], index: 4, kind: output, shape index: {1}]
  %5 = xla_tuple %s3, %s4
  %s6 = sld [smem:[#allocation0]]
  $region38: #{tpu_custom_call.1} parent=0
    _
  %s8 = ssub.s32 1, %s6
  %s9 = scalar_select 0, %s8, %s6
  $region1: #{tpu_custom_call.1} parent=0
    #allocation2 [shape = 'u8[1024]{0}', space=vmem, size = 0x400, scoped, tag = 'input window, operand 0, single buffered']
    #allocation3 [shape = 's32[1]{0}', space=sflag, size = 0x4, scoped, tag = 'scoped memory for tpu_custom_call.1']
    #allocation4 [shape = 's32[1]{0}', space=sflag, size = 0x4, scoped, tag = 'scoped memory for tpu_custom_call.1']
    #allocation5 [shape = 'u8[8192]{0}', space=vmem, size = 0x2000, scoped, tag = 'input window, operand 1, single buffered']
    #allocation6 [shape = 's32[1]{0}', space=sflag, size = 0x4, scoped, tag = 'scoped memory for tpu_custom_call.1']
    #allocation7 [shape = 'u8[1024]{0}', space=vmem, size = 0x400, scoped, tag = 'output window, operand 0, single buffered']
    #allocation8 [shape = 'u8[1024]{0}', space=vmem, size = 0x400, scoped, tag = 'output window, operand 1, single buffered']
    #allocation9 [shape = 's32[1]{0}', space=sflag, size = 0x4, scoped, tag = 'scoped memory for tpu_custom_call.1']
    %10 = vsyncpa [#allocation3], 0
    %11 = vsyncpa [#allocation6], 0
    %12 = vsyncpa [#allocation4], 0
    %13 = vsyncpa [#allocation9], 0
    // Predicated region
    $region2: #{tpu_custom_call.1} parent=1 // pred_check
      _
    $region3: #{tpu_custom_call.1} parent=1 // pred_check_branch
      %15 = sbr.rel (0) target = $region5
    $region4: #{tpu_custom_call.1} parent=1 // pred_region
      %s17 = ssub.s32 32, 32
      %18 = vsyncadd [#allocation3], %s17
      %s20 = sshll.u32 [#allocation2], 4
      %s21 = int_to_ptr.vmem [resolvable:$true] %s20
      %23 = dma.hbm_to_vmem [thread:$0]  %s0, 32, %s21, [#allocation3]
    $region5: #{tpu_custom_call.1} parent=1 // pred_fallthru
      _
    // Predicated region
    $region6: #{tpu_custom_call.1} parent=1 // pred_check
      _
    $region7: #{tpu_custom_call.1} parent=1 // pred_check_branch
      %25 = sbr.rel (0) target = $region9
    $region8: #{tpu_custom_call.1} parent=1 // pred_region
      %s27 = ssub.s32 256, 256
      %28 = vsyncadd [#allocation6], %s27
      %s29 = sshll.u32 [#allocation5], 4
      %s30 = int_to_ptr.vmem [resolvable:$true] %s29
      %35 = dma.hbm_to_vmem [thread:$0]  %s1, 256, %s30, [#allocation6], 128, 128, 8
    $region9: #{tpu_custom_call.1} parent=1 // pred_fallthru
      _
    // Predicated region
    $region10: #{tpu_custom_call.1} parent=1 // pred_check
      _
    $region11: #{tpu_custom_call.1} parent=1 // pred_check_branch
      %37 = sbr.rel (0) target = $region13
    $region12: #{tpu_custom_call.1} parent=1 // pred_region
      _
    $region13: #{tpu_custom_call.1} parent=1 // pred_fallthru
      _
    // Predicated region
    $region14: #{tpu_custom_call.1} parent=1 // pred_check
      _
    $region15: #{tpu_custom_call.1} parent=1 // pred_check_branch
      %39 = sbr.rel (0) target = $region17
    $region16: #{tpu_custom_call.1} parent=1 // pred_region
      %40 = dma.done [#allocation3], 32
    $region17: #{tpu_custom_call.1} parent=1 // pred_fallthru
      _
    // Predicated region
    $region18: #{tpu_custom_call.1} parent=1 // pred_check
      _
    $region19: #{tpu_custom_call.1} parent=1 // pred_check_branch
      %42 = sbr.rel (0) target = $region21
    $region20: #{tpu_custom_call.1} parent=1 // pred_region
      %43 = dma.done [#allocation6], 256
    $region21: #{tpu_custom_call.1} parent=1 // pred_fallthru
      _
    %v44 = vld [vmem:[#allocation2] sm:$0x3]
    %v45 = vsub.f32 0.0, %v44
    %v46 = vmul.f32 %v45, 1.442695
    %v47 = vpow.pop %v46
    %v48 = vadd.f32 %v47, 1.0
    %v49 = vrcp.pop %v48
    %v50 = vmul.f32 1.0, %v49
    %v51 = vmul.f32 %v44, %v50
    %v52 = vld [vmem:[#allocation5] sm:$0xff]
    %v53 = vld [vmem:[#allocation5 + $0x8] sm:$0xff]
    %v54 = vld [vmem:[%s2] sm:$0x1]
    %v56 = vlaneseq
    %v57 = vshrl.u32 %v56, 7
    %v58 = vsub.s32 0, %v57
    %v59 = vrot.slane %v54, %v58
    %vm61 = vcmask 130048
    %v63 = vsel %vm61, %v51, 0
    %65 = vmatprep.subr.mxu0 0.0
    %66 = vmatpush1.msra.mxu0 %v52
    %67 = vmatprep.subr.mxu0 0.0
    %68 = vmatpush1.msra.mxu0 %v53
    %69 = vmatprep.subr.mxu0 0.0
    %70 = vmatpush1.msra.mxu0 0.0
    %71 = vmatprep.subr.mxu0 0.0
    %72 = vmatpush1.msra.mxu0 0.0
    %73 = vmatprep.subr.mxu0 0.0
    %74 = vmatpush1.msra.mxu0 0.0
    %75 = vmatprep.subr.mxu0 0.0
    %76 = vmatpush1.msra.mxu0 0.0
    %77 = vmatprep.subr.mxu0 0.0
    %78 = vmatpush1.msra.mxu0 0.0
    %79 = vmatprep.subr.mxu0 0.0
    %80 = vmatpush1.msra.mxu0 0.0
    %81 = vmatprep.subr.mxu0 0.0
    %82 = vmatpush1.msra.mxu0 0.0
    %83 = vmatprep.subr.mxu0 0.0
    %84 = vmatpush1.msra.mxu0 0.0
    %85 = vmatprep.subr.mxu0 0.0
    %86 = vmatpush1.msra.mxu0 0.0
    %87 = vmatprep.subr.mxu0 0.0
    %88 = vmatpush1.msra.mxu0 0.0
    %89 = vmatprep.subr.mxu0 0.0
    %90 = vmatpush1.msra.mxu0 0.0
    %91 = vmatprep.subr.mxu0 0.0
    %92 = vmatpush1.msra.mxu0 0.0
    %93 = vmatprep.subr.mxu0 0.0
    %94 = vmatpush1.msra.mxu0 0.0
    %95 = vmatprep.subr.mxu0 0.0
    %96 = vmatpush1.msra.mxu0 0.0
    %97 = vmatprep.subr.mxu0 0.0
    %98 = vmatpush1.msra.mxu0 0.0
    %99 = vmatprep.subr.mxu0 0.0
    %100 = vmatpush1.msra.mxu0 0.0
    %101 = vmatprep.subr.mxu0 0.0
    %102 = vmatpush1.msra.mxu0 0.0
    %103 = vmatprep.subr.mxu0 0.0
    %104 = vmatpush1.msra.mxu0 0.0
    %105 = vmatprep.subr.mxu0 0.0
    %106 = vmatpush1.msra.mxu0 0.0
    %107 = vmatprep.subr.mxu0 0.0
    %108 = vmatpush1.msra.mxu0 0.0
    %109 = vmatprep.subr.mxu0 0.0
    %110 = vmatpush1.msra.mxu0 0.0
    %111 = vmatprep.subr.mxu0 0.0
    %112 = vmatpush1.msra.mxu0 0.0
    %113 = vmatprep.subr.mxu0 0.0
    %114 = vmatpush1.msra.mxu0 0.0
    %115 = vmatprep.subr.mxu0 0.0
    %116 = vmatpush1.msra.mxu0 0.0
    %117 = vmatprep.subr.mxu0 0.0
    %118 = vmatpush1.msra.mxu0 0.0
    %119 = vmatprep.subr.mxu0 0.0
    %120 = vmatpush1.msra.mxu0 0.0
    %121 = vmatprep.subr.mxu0 0.0
    %122 = vmatpush1.msra.mxu0 0.0
    %123 = vmatprep.subr.mxu0 0.0
    %124 = vmatpush1.msra.mxu0 0.0
    %125 = vmatprep.subr.mxu0 0.0
    %126 = vmatpush1.msra.mxu0 0.0
    %127 = vmatprep.subr.mxu0 0.0
    %128 = vmatpush1.msra.mxu0 0.0
    %129 = vmatprep.mubr.f32.mxu0 0.0
    %130 = vmatmul.mubr.f32.gmra.mrb[0].mxu0 %v63
    %v131 = vpop.f32.mrb[0].mxu0
    %v132 = vadd.f32 %v59, %v131
    %v133 = vpop.f32.mrb[0].mxu0
    %134 = vdwg.mxu0
    %v135 = vadd.f32 %v132, 1.0
    %vm136 = vcmask 254976
    %137 = vst.msk [vmem:[#allocation7] sm:$0x3] %vm136, %v135
    %139 = vrot.lane.b32.xlu0 %v132, 96
    %v140 = vpop.permute.xlu0 %139
    %142 = vst.msk [vmem:[#allocation8] sm:$0x3] %vm136, %v140
    // Predicated region
    $region22: #{tpu_custom_call.1} parent=1 // pred_check
      _
    $region23: #{tpu_custom_call.1} parent=1 // pred_check_branch
      %144 = sbr.rel (0) target = $region25
    $region24: #{tpu_custom_call.1} parent=1 // pred_region
      %s146 = ssub.s32 32, 32
      %147 = vsyncadd [#allocation4], %s146
      %s149 = sshll.u32 [#allocation7], 4
      %s150 = int_to_ptr.vmem [resolvable:$true] %s149
      %152 = dma.vmem_to_hbm [thread:$0]  %s150, 32, %s3, [#allocation4]
    $region25: #{tpu_custom_call.1} parent=1 // pred_fallthru
      _
    // Predicated region
    $region26: #{tpu_custom_call.1} parent=1 // pred_check
      _
    $region27: #{tpu_custom_call.1} parent=1 // pred_check_branch
      %154 = sbr.rel (0) target = $region29
    $region28: #{tpu_custom_call.1} parent=1 // pred_region
      %s156 = ssub.s32 32, 32
      %157 = vsyncadd [#allocation9], %s156
      %s159 = sshll.u32 [#allocation8], 4
      %s160 = int_to_ptr.vmem [resolvable:$true] %s159
      %162 = dma.vmem_to_hbm [thread:$0]  %s160, 32, %s4, [#allocation9]
    $region29: #{tpu_custom_call.1} parent=1 // pred_fallthru
      _
    // Predicated region
    $region30: #{tpu_custom_call.1} parent=1 // pred_check
      _
    $region31: #{tpu_custom_call.1} parent=1 // pred_check_branch
      %164 = sbr.rel (0) target = $region33
    $region32: #{tpu_custom_call.1} parent=1 // pred_region
      %165 = dma.done [#allocation4], 32
    $region33: #{tpu_custom_call.1} parent=1 // pred_fallthru
      _
    // Predicated region
    $region34: #{tpu_custom_call.1} parent=1 // pred_check
      _
    $region35: #{tpu_custom_call.1} parent=1 // pred_check_branch
      %167 = sbr.rel (0) target = $region37
    $region36: #{tpu_custom_call.1} parent=1 // pred_region
      %168 = dma.done [#allocation9], 32
    $region37: #{tpu_custom_call.1} parent=1 // pred_fallthru
      _
    %169 = vsyncpa [#allocation3], 1
    %170 = vsyncpa [#allocation6], 1
    %171 = vsyncpa [#allocation4], 1
    %172 = vsyncpa [#allocation9], 1

</llo_original>
